<compile_context>
chip_gen: v7x
topology: tpu7x:2x2x1
jax: 0.10.0
libtpu: 0.0.40
codegen_flags: <defaults>
</compile_context>

<pallas_src>
import functools

import jax
import jax.numpy as jnp
from jax.experimental import pallas as pl
from jax.experimental.pallas import tpu as pltpu


def _ce_tile_kernel(logits_ref, target_ref, out_ref, *, tile_n, n_total):
    """One (TILE_N, C) logits tile -> partial sum of -log_softmax(x)[target]."""
    i = pl.program_id(0)

    x = logits_ref[...]                                    # (TILE_N, C) native dtype
    tgt = target_ref[...]                                  # (TILE_N, 1) int32
    c = x.shape[-1]

    # Target pick from the *unshifted*, native-dtype logits. Exact: the row sum
    # has a single nonzero term.  Note: targets outside [0, C) (e.g. torch's
    # ignore_index=-100) never match and silently contribute logsumexp.
    col_ids = jax.lax.broadcasted_iota(jnp.int32, (1, c), 1)          # (1, C)
    hit = col_ids == tgt                                              # (TILE_N, C)
    picked = jnp.sum(jnp.where(hit, x, jnp.zeros_like(x)),
                     axis=-1, keepdims=True).astype(jnp.float32)      # (TILE_N, 1)

    # Row max in native dtype (exact; half-cost for bf16 on v6e/v7x).
    m32 = jnp.max(x, axis=-1, keepdims=True).astype(jnp.float32)      # (TILE_N, 1)

    # exp / sum / log in f32 for numerical stability.
    xs = x.astype(jnp.float32) - m32
    sum_exp = jnp.sum(jnp.exp(xs), axis=-1, keepdims=True)            # (TILE_N, 1)
    row_loss = m32 + jnp.log(sum_exp) - picked                        # (TILE_N, 1)

    # Mask rows past the true N (padded last tile may hold garbage -> NaN/Inf
    # row_loss, which the select drops), reduce to one scalar per tile, and
    # store it into element [0, 0] of a conforming, lane-dense (8, 128) block.
    row_ids = i * tile_n + jax.lax.broadcasted_iota(jnp.int32, (tile_n, 1), 0)
    tile_sum = jnp.sum(jnp.where(row_ids < n_total, row_loss, 0.0),
                       axis=0, keepdims=True)                         # (1, 1)

    sel = ((jax.lax.broadcasted_iota(jnp.int32, (8, 128), 0) == 0)
           & (jax.lax.broadcasted_iota(jnp.int32, (8, 128), 1) == 0))
    out_ref[...] = jnp.where(sel, tile_sum, 0.0)                      # (8, 128)


def _round_up(x, m):
    return ((x + m - 1) // m) * m


_F32_TEMPS = 4  # x_f32 / xs / exp(xs) / hit-mask class of live (TILE_N, C) temps


def _choose_tile_n(n, c, itemsize):
    # Sublane packing: 8 rows for f32, 16 for bf16, 32 for int8/fp8.
    row_mult = max(8, 32 // itemsize)
    if n <= 2 * row_mult:
        return n                      # tiny case: one tile, block == full row dim
    # Budget against v5e's 16 MiB *scoped* VMEM default, counting the f32
    # intermediates, not just the double-buffered native tile.
    budget = 12 * 1024 * 1024
    per_row = c * (2 * itemsize + _F32_TEMPS * 4) + 16
    t = max(row_mult, min(budget // per_row, 4096))
    t = (t // row_mult) * row_mult
    # Keep >= 2 grid steps so the "parallel" axis can shard rows across both
    # v7x TensorCores (near-zero impact on v5e/v6e).
    t = min(t, _round_up(-(-n // 2), row_mult))
    return t


def _vmem_footprint(tile_n, c, itemsize):
    native = tile_n * c * itemsize
    f32 = tile_n * c * 4
    # 2x double-buffered native input + f32 temps + target/output buffers.
    return 2 * native + _F32_TEMPS * f32 + 2 * (tile_n * 4 + 8 * 128 * 4) + (1 << 16)


def cross_entropy_loss(logits, target, *, tile_n=None):
    """logits: (N, C) float (any dtype); target: (N,) int class indices.

    Returns the scalar mean cross-entropy (== torch.nn.CrossEntropyLoss()).
    """
    n, c = logits.shape
    itemsize = jnp.dtype(logits.dtype).itemsize
    if tile_n is None:
        tile_n = _choose_tile_n(n, c, itemsize)
    tile_n = max(1, min(tile_n, n))
    grid_n = pl.cdiv(n, tile_n)

    tgt2d = target.astype(jnp.int32).reshape(n, 1)

    # Explicit scoped-VMEM limit: enough for this kernel's footprint, capped at
    # ~48 MiB so a huge-C configuration still fits v7x's 64 MiB VMEM.
    vmem_limit = int(min(48 * 1024 * 1024,
                         max(16 * 1024 * 1024,
                             _vmem_footprint(tile_n, c, itemsize) + (4 << 20))))

    kernel = functools.partial(_ce_tile_kernel, tile_n=tile_n, n_total=n)

    partials = pl.pallas_call(
        kernel,
        out_shape=jax.ShapeDtypeStruct((grid_n * 8, 128), jnp.float32),
        grid=(grid_n,),
        in_specs=[
            pl.BlockSpec((tile_n, c), lambda i: (i, 0)),   # logits tile (native dtype)
            pl.BlockSpec((tile_n, 1), lambda i: (i, 0)),   # target column
        ],
        out_specs=pl.BlockSpec((8, 128), lambda i: (i, 0)),
        compiler_params=pltpu.CompilerParams(
            dimension_semantics=("parallel",),
            vmem_limit_bytes=vmem_limit,
        ),
        cost_estimate=pl.CostEstimate(
            flops=6 * n * c,
            transcendentals=n * c,
            bytes_accessed=n * c * itemsize + n * 4 + grid_n * 8 * 128 * 4,
        ),
    )(logits, tgt2d)

    # Tiny epilogue: sum the per-tile partials (all other slots are zero) and
    # divide by the true N.
    return jnp.sum(partials) / jnp.float32(n)


def _ref_ce(logits_f32, target):
    n = logits_f32.shape[0]
    return jnp.mean(jax.nn.logsumexp(logits_f32, axis=-1)
                    - logits_f32[jnp.arange(n), target])


if __name__ == "__main__":
    key = jax.random.PRNGKey(0)
    k1, k2, k3, k4, k5, k6 = jax.random.split(key, 6)

    # 1) small single-tile case, f32 logits (torch default dtype)
    N, C = 8, 32
    logits = jax.random.normal(k1, (N, C), dtype=jnp.float32)
    target = jax.random.randint(k2, (N,), 0, C, dtype=jnp.int32)
    loss = cross_entropy_loss(logits, target)
    jax.block_until_ready(loss)
    assert jnp.allclose(loss, _ref_ce(logits, target), atol=1e-5, rtol=1e-5), loss

    # 2) multi-tile bf16 case (tile_n aligned to the bf16 sublane pack of 16)
    N2, C2 = 32, 64
    logits2 = jax.random.normal(k3, (N2, C2), dtype=jnp.float32).astype(jnp.bfloat16)
    target2 = jax.random.randint(k4, (N2,), 0, C2, dtype=jnp.int32)
    loss2 = cross_entropy_loss(logits2, target2, tile_n=16)
    jax.block_until_ready(loss2)
    ref2 = _ref_ce(logits2.astype(jnp.float32), target2)
    assert jnp.allclose(loss2, ref2, atol=1e-4, rtol=1e-4), (loss2, ref2)

    # 3) non-multiple N -> exercises the partial last tile + row-validity mask
    N3, C3 = 20, 128
    logits3 = jax.random.normal(k5, (N3, C3), dtype=jnp.float32)
    target3 = jax.random.randint(k6, (N3,), 0, C3, dtype=jnp.int32)
    loss3 = cross_entropy_loss(logits3, target3)
    jax.block_until_ready(loss3)
    assert jnp.allclose(loss3, _ref_ce(logits3, target3), atol=1e-5, rtol=1e-5), loss3

    print("KERNEL_OK")
</pallas_src>

<mosaic_0001>
module attributes {stable_mosaic.version = 11 : i64} {
  func.func @_ce_tile_kernel(%arg0: i32, %arg1: memref<8x32xf32, #tpu.memory_space<vmem>>, %arg2: memref<8x1xi32, #tpu.memory_space<vmem>>, %arg3: memref<8x128xf32, #tpu.memory_space<vmem>>) attributes {dimension_semantics = [#tpu.dimension_semantics<parallel>], iteration_bounds = array<i64: 1>, scalar_prefetch = 0 : i64, scratch_operands = 0 : i64, tpu.core_type = #tpu.core_type<tc>, window_params = [{transform_indices = @transform_0, window_bounds = array<i64: 8, 32>}, {transform_indices = @transform_1, window_bounds = array<i64: 8, 1>}, {transform_indices = @transform_2, window_bounds = array<i64: 8, 128>}]} {
    %c0 = arith.constant 0 : index
    %c0_0 = arith.constant 0 : index
    %0 = vector.load %arg1[%c0, %c0_0] : memref<8x32xf32, #tpu.memory_space<vmem>>, vector<8x32xf32>
    %c0_1 = arith.constant 0 : index
    %c0_2 = arith.constant 0 : index
    %1 = vector.load %arg2[%c0_1, %c0_2] : memref<8x1xi32, #tpu.memory_space<vmem>>, vector<8x1xi32>
    %2 = tpu.iota {dimensions = array<i32: 1>} : vector<1x32xi32>
    %3 = vector.broadcast %2 : vector<1x32xi32> to vector<8x32xi32>
    %4 = vector.broadcast %1 : vector<8x1xi32> to vector<8x32xi32>
    %5 = arith.cmpi eq, %3, %4 : vector<8x32xi32>
    %cst = arith.constant 0.000000e+00 : f32
    %6 = vector.broadcast %cst : f32 to vector<8x32xf32>
    %7 = arith.select %5, %0, %6 : vector<8x32xi1>, vector<8x32xf32>
    %cst_3 = arith.constant dense<0.000000e+00> : vector<8xf32>
    %8 = vector.multi_reduction <add>, %7, %cst_3 [1] : vector<8x32xf32> to vector<8xf32>
    %9 = vector.shape_cast %8 : vector<8xf32> to vector<8x1xf32>
    %cst_4 = arith.constant dense<0xFF800000> : vector<8xf32>
    %10 = vector.multi_reduction <maximumf>, %0, %cst_4 [1] : vector<8x32xf32> to vector<8xf32>
    %11 = vector.shape_cast %10 : vector<8xf32> to vector<8x1xf32>
    %12 = vector.broadcast %11 : vector<8x1xf32> to vector<8x32xf32>
    %13 = arith.subf %0, %12 : vector<8x32xf32>
    %14 = math.exp %13 : vector<8x32xf32>
    %cst_5 = arith.constant dense<0.000000e+00> : vector<8xf32>
    %15 = vector.multi_reduction <add>, %14, %cst_5 [1] : vector<8x32xf32> to vector<8xf32>
    %16 = vector.shape_cast %15 : vector<8xf32> to vector<8x1xf32>
    %17 = math.log %16 : vector<8x1xf32>
    %18 = arith.addf %11, %17 : vector<8x1xf32>
    %19 = arith.subf %18, %9 : vector<8x1xf32>
    %c8_i32 = arith.constant 8 : i32
    %20 = arith.muli %arg0, %c8_i32 : i32
    %21 = tpu.iota {dimensions = array<i32: 0>} : vector<8x1xi32>
    %22 = vector.broadcast %20 : i32 to vector<8x1xi32>
    %23 = arith.addi %22, %21 : vector<8x1xi32>
    %c8_i32_6 = arith.constant 8 : i32
    %24 = vector.broadcast %c8_i32_6 : i32 to vector<8x1xi32>
    %25 = arith.cmpi slt, %23, %24 : vector<8x1xi32>
    %cst_7 = arith.constant 0.000000e+00 : f32
    %26 = vector.broadcast %cst_7 : f32 to vector<8x1xf32>
    %27 = arith.select %25, %19, %26 : vector<8x1xi1>, vector<8x1xf32>
    %cst_8 = arith.constant dense<0.000000e+00> : vector<1xf32>
    %28 = vector.multi_reduction <add>, %27, %cst_8 [0] : vector<8x1xf32> to vector<1xf32>
    %29 = vector.shape_cast %28 : vector<1xf32> to vector<1x1xf32>
    %30 = tpu.iota {dimensions = array<i32: 0>} : vector<8x128xi32>
    %c0_i32 = arith.constant 0 : i32
    %31 = vector.broadcast %c0_i32 : i32 to vector<8x128xi32>
    %32 = arith.cmpi eq, %30, %31 : vector<8x128xi32>
    %33 = tpu.iota {dimensions = array<i32: 1>} : vector<8x128xi32>
    %c0_i32_9 = arith.constant 0 : i32
    %34 = vector.broadcast %c0_i32_9 : i32 to vector<8x128xi32>
    %35 = arith.cmpi eq, %33, %34 : vector<8x128xi32>
    %36 = arith.andi %32, %35 : vector<8x128xi1>
    %cst_10 = arith.constant 0.000000e+00 : f32
    %37 = vector.shape_cast %29 : vector<1x1xf32> to vector<1x1xf32>
    %38 = vector.broadcast %37 : vector<1x1xf32> to vector<8x128xf32>
    %39 = vector.broadcast %cst_10 : f32 to vector<8x128xf32>
    %40 = arith.select %36, %38, %39 : vector<8x128xi1>, vector<8x128xf32>
    %c0_11 = arith.constant 0 : index
    %c0_12 = arith.constant 0 : index
    %41 = vector.load %arg3[%c0_11, %c0_12] : memref<8x128xf32, #tpu.memory_space<vmem>>, vector<8x128xf32>
    tpu.vector_store %arg3[%c0_11, %c0_12], %40 {strides = array<i32>} : memref<8x128xf32, #tpu.memory_space<vmem>>, vector<8x128xf32>,
    return
  }
  func.func @transform_0(%arg0: i32) -> (i32, i32) {
    %c0_i32 = arith.constant 0 : i32
    %c0_i32_0 = arith.constant 0 : i32
    return %arg0, %c0_i32 : i32, i32
  }
  func.func @transform_1(%arg0: i32) -> (i32, i32) {
    %c0_i32 = arith.constant 0 : i32
    %c0_i32_0 = arith.constant 0 : i32
    return %arg0, %c0_i32 : i32, i32
  }
  func.func @transform_2(%arg0: i32) -> (i32, i32) {
    %c0_i32 = arith.constant 0 : i32
    %c0_i32_0 = arith.constant 0 : i32
    return %arg0, %c0_i32 : i32, i32
  }
}

</mosaic_0001>

<llo_original>
// kernel: tpu_custom_call.1
$region0: #{tpu_custom_call.1}
  #allocation0 [shape = 'u32[]', space=smem, size = 0x4, offset = 0x4, fixed_abs, tag = 'smem constant byte address 0x4 - core index']
  #allocation1 [shape = 'u32[144,128]{1,0:T(1,128)}', space=vmem, size = 0x12000, scoped, tag = 'internal scratch']
  %s0 = inlined_call_operand.vmem [shape: f32[8,32], index: 0, kind: input, shape index: {}]
  %s1 = inlined_call_operand.vmem [shape: s32[8,1], index: 1, kind: input, shape index: {}]
  %s2 = inlined_call_operand.hbm [shape: f32[8,128], index: 2, kind: output, shape index: {}]
  %s3 = sld [smem:[#allocation0]]
  $region18: #{tpu_custom_call.1} parent=0
    _
  %s5 = ssub.s32 1, %s3
  %s6 = scalar_select 0, %s5, %s3
  $region1: #{tpu_custom_call.1} parent=0
    #allocation2 [shape = 'u8[4096]{0}', space=vmem, size = 0x1000, scoped, tag = 'output window, operand 0, single buffered']
    #allocation3 [shape = 's32[1]{0}', space=sflag, size = 0x4, scoped, tag = 'scoped memory for tpu_custom_call.1']
    %7 = vsyncpa [#allocation3], 0
    // Predicated region
    $region2: #{tpu_custom_call.1} parent=1 // pred_check
      _
    $region3: #{tpu_custom_call.1} parent=1 // pred_check_branch
      %9 = sbr.rel (0) target = $region5
    $region4: #{tpu_custom_call.1} parent=1 // pred_region
      _
    $region5: #{tpu_custom_call.1} parent=1 // pred_fallthru
      _
    // Predicated region
    $region6: #{tpu_custom_call.1} parent=1 // pred_check
      _
    $region7: #{tpu_custom_call.1} parent=1 // pred_check_branch
      %11 = sbr.rel (0) target = $region9
    $region8: #{tpu_custom_call.1} parent=1 // pred_region
      _
    $region9: #{tpu_custom_call.1} parent=1 // pred_fallthru
      _
    %v12 = vld [vmem:[%s0] sm:$0xff]
    %v13 = vld [vmem:[%s1] sm:$0xff]
    %v14 = vlaneseq
    %v15 = vand.u32 %v14, 127
    %16 = vset.pattern.permute.xlu0 0
    %17 = vperm.xlu0 %16, %v13
    %v18 = vpop.permute.xlu0 %17
    %vm19 = vcmp.eq.s32.totalorder %v15, %v18
    %v20 = vsel %vm19, %v12, 0.0
    %vm21 = vcmask 261120
    %v22 = vsel %vm21, %v20, 0.0
    %23 = vadd.xlane.f32.xlu0 %v22
    %v24 = vpop.xlane.xlu0 %23
    %v25 = vsel %vm21, %v12, -inf
    %26 = vmax.xlane.f32.xlu0 %v25
    %v27 = vpop.xlane.xlu0 %26
    %v28 = vsub.f32 %v12, %v27
    %v29 = vmul.f32 %v28, 1.442695
    %v30 = vpow.pop %v29
    %v31 = vsel %vm21, %v30, 0.0
    %32 = vadd.xlane.f32.xlu0 %v31
    %v33 = vpop.xlane.xlu0 %32
    %v34 = vlog2.pop %v33
    %v35 = vmul.f32 %v34, 0.6931472
    %v36 = vadd.f32 %v27, %v35
    %v37 = vsub.f32 %v36, %v24
    %s38 = smul.u32 0, 8
    %v39 = vlaneseq
    %v40 = vshrl.u32 %v39, 7
    %v41 = vstv %s38
    %v42 = vadd.s32 %v41, %v40
    %vm43 = vcmp.lt.s32.totalorder %v42, 8
    %v44 = vsel %vm43, %v37, 0.0
    %v45 = vrot.slane %v44, 4
    %v46 = vadd.f32 %v44, %v45
    %v47 = vrot.slane %v46, 2
    %v48 = vadd.f32 %v46, %v47
    %v49 = vrot.slane %v48, 1
    %v50 = vadd.f32 %v48, %v49
    %vm51 = vcmp.eq.s32.totalorder %v40, 0
    %vm52 = vcmp.eq.s32.totalorder %v15, 0
    %vm53 = vmand %vm51, %vm52
    %v54 = vsel %vm53, %v50, 0.0
    %55 = vst [vmem:[#allocation2] sm:$0xff] %v54
    // Predicated region
    $region10: #{tpu_custom_call.1} parent=1 // pred_check
      _
    $region11: #{tpu_custom_call.1} parent=1 // pred_check_branch
      %57 = sbr.rel (0) target = $region13
    $region12: #{tpu_custom_call.1} parent=1 // pred_region
      %s59 = ssub.s32 128, 128
      %60 = vsyncadd [#allocation3], %s59
      %s62 = sshll.u32 [#allocation2], 4
      %s63 = int_to_ptr.vmem [resolvable:$true] %s62
      %65 = dma.vmem_to_hbm [thread:$0]  %s63, 128, %s2, [#allocation3]
    $region13: #{tpu_custom_call.1} parent=1 // pred_fallthru
      _
    // Predicated region
    $region14: #{tpu_custom_call.1} parent=1 // pred_check
      _
    $region15: #{tpu_custom_call.1} parent=1 // pred_check_branch
      %67 = sbr.rel (0) target = $region17
    $region16: #{tpu_custom_call.1} parent=1 // pred_region
      %68 = dma.done [#allocation3], 128
    $region17: #{tpu_custom_call.1} parent=1 // pred_fallthru
      _
    %69 = vsyncpa [#allocation3], 1

</llo_original>
